<compile_context>
chip_gen: v6e
topology: v6e:2x2x1
jax: 0.10.0
libtpu: 0.0.40
codegen_flags: <defaults>
</compile_context>

<pallas_src>
import functools

import jax
import jax.numpy as jnp
from jax import lax
from jax.experimental import pallas as pl
from jax.experimental.pallas import tpu as pltpu

LN_EPS = 1e-5


def _self_attention_kernel(x_ref, g_ref, bta_ref, w_ref, o_ref, q_scr, k_scr,
                           *, heads, dim_head, tq):
    # x_ref:   (n, dim)         full sequence of the current batch element
    # g_ref:   (1, dim)         LayerNorm gamma
    # bta_ref: (1, dim)         LayerNorm beta
    # w_ref:   (dim, 2*inner)   [Wq * scale | Wk], already transposed
    # o_ref:   (tq, heads*n)    query-tile of the output, heads flattened into lanes
    # q_scr:   (n, inner)       scratch: scaled q projection (persists across q tiles)
    # k_scr:   (n, inner)       scratch: k projection
    qi = pl.program_id(1)
    inner = heads * dim_head
    n = k_scr.shape[0]
    mxu_dt = q_scr.dtype  # f32, or bf16 when use_bf16=True

    @pl.when(qi == 0)
    def _():
        # LayerNorm (biased variance, like torch.nn.LayerNorm) + fused q/k
        # projection, computed once per batch element.
        x = x_ref[...]                                        # (n, dim)
        mu = jnp.mean(x, axis=-1, keepdims=True)
        xc = x - mu
        var = jnp.mean(xc * xc, axis=-1, keepdims=True)
        xn = xc * lax.rsqrt(var + LN_EPS)
        xn = xn * g_ref[0] + bta_ref[0]                       # (n, dim), f32
        qk = jnp.dot(xn.astype(mxu_dt), w_ref[...].astype(mxu_dt),
                     preferred_element_type=jnp.float32)      # (n, 2*inner)
        q_scr[...] = qk[:, :inner].astype(q_scr.dtype)        # already scaled via Wq
        k_scr[...] = qk[:, inner:].astype(k_scr.dtype)

    row0 = pl.multiple_of(qi * tq, tq)
    # dots[i, h, j] = sum_d q[i, h*dh+d] * k[j, h*dh+d]; each head is written as
    # an adjacent (tq, n) lane block so the HBM layout is already 'b n h j'.
    for h in range(heads):
        qh = q_scr[pl.ds(row0, tq), pl.ds(h * dim_head, dim_head)]  # (tq, d)
        kh = k_scr[:, pl.ds(h * dim_head, dim_head)]                # (n, d)
        dots_h = lax.dot_general(
            qh, kh,
            dimension_numbers=(((1,), (1,)), ((), ())),   # contract d, no k.T
            preferred_element_type=jnp.float32)           # (tq, n)
        o_ref[:, h * n:(h + 1) * n] = dots_h


def self_attention_pallas(x, ln_weight, ln_bias, to_qk_weight, *, heads, dim_head,
                          q_tile=None, use_bf16=False):
    """Pallas implementation of SelfAttention.forward.

    Args:
      x:            (b, n, dim) float32
      ln_weight:    (dim,) LayerNorm gamma
      ln_bias:      (dim,) LayerNorm beta
      to_qk_weight: (2*inner_dim, dim) — PyTorch nn.Linear weight layout
      heads, dim_head: module hyperparameters
      q_tile:       query-axis tile (defaults to n; use e.g. 256 for large n)
      use_bf16:     feed bf16 to the MXU (v6e/v7x); accumulation stays f32

    Returns:
      attn of shape (b, n, heads, n), matching the PyTorch module.
    """
    b, n, dim = x.shape
    inner_dim = heads * dim_head
    assert to_qk_weight.shape == (2 * inner_dim, dim)
    scale = float(dim_head) ** -0.5

    if q_tile is None:
        q_tile = n
    assert n % q_tile == 0 and (q_tile == n or q_tile % 8 == 0)

    # y = x @ W.T ; chunk(2, dim=-1) splits the output features into q | k.
    w_t = to_qk_weight.T.astype(jnp.float32)                  # (dim, 2*inner)
    w_cat = jnp.concatenate(
        [w_t[:, :inner_dim] * scale,                          # fold scale into Wq
         w_t[:, inner_dim:]], axis=1)                         # (dim, 2*inner)

    gamma = ln_weight.reshape(1, dim).astype(jnp.float32)
    beta = ln_bias.reshape(1, dim).astype(jnp.float32)

    mxu_dtype = jnp.bfloat16 if use_bf16 else jnp.float32

    kernel = functools.partial(_self_attention_kernel, heads=heads,
                               dim_head=dim_head, tq=q_tile)

    out_flat = pl.pallas_call(
        kernel,
        out_shape=jax.ShapeDtypeStruct((b, n, heads * n), jnp.float32),
        grid_spec=pltpu.PrefetchScalarGridSpec(
            num_scalar_prefetch=0,
            grid=(b, n // q_tile),
            in_specs=[
                # x: fetched once per batch element (index unchanged across q tiles)
                pl.BlockSpec((None, n, dim), lambda bi, qi: (bi, 0, 0)),
                # gamma / beta / fused weight: resident (constant index map)
                pl.BlockSpec((1, dim), lambda bi, qi: (0, 0)),
                pl.BlockSpec((1, dim), lambda bi, qi: (0, 0)),
                pl.BlockSpec((dim, 2 * inner_dim), lambda bi, qi: (0, 0)),
            ],
            # lane-dense output block; heads*n equals the full last dim
            out_specs=pl.BlockSpec((None, q_tile, heads * n),
                                   lambda bi, qi: (bi, qi, 0)),
            scratch_shapes=[
                pltpu.VMEM((n, inner_dim), mxu_dtype),   # q (already scaled)
                pltpu.VMEM((n, inner_dim), mxu_dtype),   # k
            ],
        ),
        compiler_params=pltpu.CompilerParams(
            # batch axis can be sharded across TensorCores (v7x megacore);
            # the q-tile axis carries per-batch scratch so it stays "arbitrary".
            dimension_semantics=("parallel", "arbitrary"),
        ),
    )(x.astype(jnp.float32), gamma, beta, w_cat)

    # (b, n, heads*n) -> (b, n, heads, n): trailing-dim split, free (no HBM pass).
    return out_flat.reshape(b, n, heads, n)


def _reference(x, ln_weight, ln_bias, to_qk_weight, *, heads, dim_head):
    # Pure-JAX reference mirroring the PyTorch forward.
    inner_dim = heads * dim_head
    mu = jnp.mean(x, axis=-1, keepdims=True)
    var = jnp.mean((x - mu) ** 2, axis=-1, keepdims=True)
    xn = (x - mu) / jnp.sqrt(var + LN_EPS) * ln_weight + ln_bias
    qk = xn @ to_qk_weight.T                          # (b, n, 2*inner)
    q, k = qk[..., :inner_dim], qk[..., inner_dim:]
    b, n, _ = x.shape
    q = q.reshape(b, n, heads, dim_head).transpose(0, 2, 1, 3)
    k = k.reshape(b, n, heads, dim_head).transpose(0, 2, 1, 3)
    dots = jnp.einsum("bhid,bhjd->bhij", q, k) * (float(dim_head) ** -0.5)
    return jnp.transpose(dots, (0, 2, 1, 3))          # b h i j -> b i h j


if __name__ == "__main__":
    # Small shapes consistent with the module's forward.
    B, N, DIM = 2, 16, 32
    HEADS, DIM_HEAD = 4, 8
    INNER = HEADS * DIM_HEAD

    key = jax.random.PRNGKey(0)
    kx, kw, kg, kb = jax.random.split(key, 4)

    x = jax.random.normal(kx, (B, N, DIM), dtype=jnp.float32)
    to_qk_weight = (jax.random.normal(kw, (2 * INNER, DIM), dtype=jnp.float32)
                    * (DIM ** -0.5))
    ln_weight = 1.0 + 0.1 * jax.random.normal(kg, (DIM,), dtype=jnp.float32)
    ln_bias = 0.1 * jax.random.normal(kb, (DIM,), dtype=jnp.float32)

    attn = self_attention_pallas(
        x, ln_weight, ln_bias, to_qk_weight, heads=HEADS, dim_head=DIM_HEAD
    )
    attn = jax.block_until_ready(attn)

    ref = _reference(
        x, ln_weight, ln_bias, to_qk_weight, heads=HEADS, dim_head=DIM_HEAD
    )
    assert attn.shape == (B, N, HEADS, N), attn.shape
    assert jnp.allclose(attn, ref, atol=1e-4, rtol=1e-4), "mismatch vs reference"

    print("KERNEL_OK")
</pallas_src>

<mosaic_0001>
module attributes {stable_mosaic.version = 11 : i64} {
  func.func @_self_attention_kernel(%arg0: i32, %arg1: i32, %arg2: memref<1x16x32xf32, #tpu.memory_space<vmem>>, %arg3: memref<1x32xf32, #tpu.memory_space<vmem>>, %arg4: memref<1x32xf32, #tpu.memory_space<vmem>>, %arg5: memref<32x64xf32, #tpu.memory_space<vmem>>, %arg6: memref<1x16x64xf32, #tpu.memory_space<vmem>>, %arg7: memref<16x32xf32, #tpu.memory_space<vmem>>, %arg8: memref<16x32xf32, #tpu.memory_space<vmem>>) attributes {dimension_semantics = [#tpu.dimension_semantics<parallel>, #tpu.dimension_semantics<arbitrary>], iteration_bounds = array<i64: 2, 1>, scalar_prefetch = 0 : i64, scratch_operands = 2 : i64, tpu.core_type = #tpu.core_type<tc>, window_params = [{transform_indices = @transform_0, window_bounds = array<i64: 1, 16, 32>}, {pipeline_mode = #tpu.pipeline_mode<synchronous>, transform_indices = @transform_1, window_bounds = array<i64: 1, 32>}, {pipeline_mode = #tpu.pipeline_mode<synchronous>, transform_indices = @transform_2, window_bounds = array<i64: 1, 32>}, {pipeline_mode = #tpu.pipeline_mode<synchronous>, transform_indices = @transform_3, window_bounds = array<i64: 32, 64>}, {transform_indices = @transform_4, window_bounds = array<i64: 1, 16, 64>}]} {
    %c0_i32 = arith.constant 0 : i32
    %0 = arith.cmpi eq, %arg1, %c0_i32 : i32
    %1 = arith.extui %0 : i1 to i32
    %c0_i32_0 = arith.constant 0 : i32
    %2 = arith.cmpi ne, %1, %c0_i32_0 : i32
    scf.if %2 {
      %c0_22 = arith.constant 0 : index
      %c0_23 = arith.constant 0 : index
      %c0_24 = arith.constant 0 : index
      %33 = vector.load %arg2[%c0_22, %c0_23, %c0_24] : memref<1x16x32xf32, #tpu.memory_space<vmem>>, vector<1x16x32xf32>
      %34 = vector.shape_cast %33 : vector<1x16x32xf32> to vector<16x32xf32>
      %cst_25 = arith.constant dense<0.000000e+00> : vector<16xf32>
      %35 = vector.multi_reduction <add>, %34, %cst_25 [1] : vector<16x32xf32> to vector<16xf32>
      %36 = vector.shape_cast %35 : vector<16xf32> to vector<16x1xf32>
      %cst_26 = arith.constant 3.200000e+01 : f32
      %37 = vector.broadcast %cst_26 : f32 to vector<16x1xf32>
      %38 = arith.divf %36, %37 : vector<16x1xf32>
      %39 = vector.broadcast %38 : vector<16x1xf32> to vector<16x32xf32>
      %40 = arith.subf %34, %39 : vector<16x32xf32>
      %41 = arith.mulf %40, %40 : vector<16x32xf32>
      %cst_27 = arith.constant dense<0.000000e+00> : vector<16xf32>
      %42 = vector.multi_reduction <add>, %41, %cst_27 [1] : vector<16x32xf32> to vector<16xf32>
      %43 = vector.shape_cast %42 : vector<16xf32> to vector<16x1xf32>
      %cst_28 = arith.constant 3.200000e+01 : f32
      %44 = vector.broadcast %cst_28 : f32 to vector<16x1xf32>
      %45 = arith.divf %43, %44 : vector<16x1xf32>
      %cst_29 = arith.constant 9.99999974E-6 : f32
      %46 = vector.broadcast %cst_29 : f32 to vector<16x1xf32>
      %47 = arith.addf %45, %46 : vector<16x1xf32>
      %48 = math.rsqrt %47 : vector<16x1xf32>
      %49 = vector.broadcast %48 : vector<16x1xf32> to vector<16x32xf32>
      %50 = arith.mulf %40, %49 : vector<16x32xf32>
      %c0_30 = arith.constant 0 : index
      %c0_31 = arith.constant 0 : index
      %51 = vector.load %arg3[%c0_30, %c0_31] : memref<1x32xf32, #tpu.memory_space<vmem>>, vector<1x32xf32>
      %52 = vector.shape_cast %51 : vector<1x32xf32> to vector<32xf32>
      %53 = vector.shape_cast %52 : vector<32xf32> to vector<1x32xf32>
      %54 = vector.broadcast %53 : vector<1x32xf32> to vector<16x32xf32>
      %55 = arith.mulf %50, %54 : vector<16x32xf32>
      %c0_32 = arith.constant 0 : index
      %c0_33 = arith.constant 0 : index
      %56 = vector.load %arg4[%c0_32, %c0_33] : memref<1x32xf32, #tpu.memory_space<vmem>>, vector<1x32xf32>
      %57 = vector.shape_cast %56 : vector<1x32xf32> to vector<32xf32>
      %58 = vector.shape_cast %57 : vector<32xf32> to vector<1x32xf32>
      %59 = vector.broadcast %58 : vector<1x32xf32> to vector<16x32xf32>
      %60 = arith.addf %55, %59 : vector<16x32xf32>
      %c0_34 = arith.constant 0 : index
      %c0_35 = arith.constant 0 : index
      %61 = vector.load %arg5[%c0_34, %c0_35] : memref<32x64xf32, #tpu.memory_space<vmem>>, vector<32x64xf32>
      %cst_36 = arith.constant dense<0.000000e+00> : vector<16x64xf32>
      %62 = tpu.matmul %60, %61, %cst_36 {dimension_numbers = #tpu.dot_dimension_numbers<[1], [0], [0], [1], [0, 0, 1, 1], [], []>} : vector<16x32xf32>, vector<32x64xf32>, vector<16x64xf32> -> vector<16x64xf32>
      %63 = vector.extract_strided_slice %62 {offsets = [0, 0], sizes = [16, 32], strides = [1, 1]} : vector<16x64xf32> to vector<16x32xf32>
      %c0_37 = arith.constant 0 : index
      %c0_38 = arith.constant 0 : index
      %64 = vector.load %arg7[%c0_37, %c0_38] : memref<16x32xf32, #tpu.memory_space<vmem>>, vector<16x32xf32>
      tpu.vector_store %arg7[%c0_37, %c0_38], %63 {strides = array<i32>} : memref<16x32xf32, #tpu.memory_space<vmem>>, vector<16x32xf32>,
      %65 = vector.extract_strided_slice %62 {offsets = [0, 32], sizes = [16, 32], strides = [1, 1]} : vector<16x64xf32> to vector<16x32xf32>
      %c0_39 = arith.constant 0 : index
      %c0_40 = arith.constant 0 : index
      %66 = vector.load %arg8[%c0_39, %c0_40] : memref<16x32xf32, #tpu.memory_space<vmem>>, vector<16x32xf32>
      tpu.vector_store %arg8[%c0_39, %c0_40], %65 {strides = array<i32>} : memref<16x32xf32, #tpu.memory_space<vmem>>, vector<16x32xf32>,
    } else {
    }
    %c16_i32 = arith.constant 16 : i32
    %3 = arith.muli %arg1, %c16_i32 : i32
    %4 = tpu.assume_multiple %3, 16 : i32
    %5 = arith.index_cast %4 : i32 to index
    %c0 = arith.constant 0 : index
    %6 = vector.load %arg7[%5, %c0] : memref<16x32xf32, #tpu.memory_space<vmem>>, vector<16x8xf32>
    %c0_1 = arith.constant 0 : index
    %c0_2 = arith.constant 0 : index
    %7 = vector.load %arg8[%c0_1, %c0_2] : memref<16x32xf32, #tpu.memory_space<vmem>>, vector<16x8xf32>
    %cst = arith.constant dense<0.000000e+00> : vector<16x16xf32>
    %8 = tpu.matmul %6, %7, %cst {dimension_numbers = #tpu.dot_dimension_numbers<[1], [1], [0], [0], [0, 0, 1, 0], [], []>} : vector<16x8xf32>, vector<16x8xf32>, vector<16x16xf32> -> vector<16x16xf32>
    %c0_3 = arith.constant 0 : index
    %c0_4 = arith.constant 0 : index
    %c0_5 = arith.constant 0 : index
    %9 = vector.load %arg6[%c0_3, %c0_4, %c0_5] : memref<1x16x64xf32, #tpu.memory_space<vmem>>, vector<1x16x16xf32>
    %10 = vector.shape_cast %9 : vector<1x16x16xf32> to vector<16x16xf32>
    %11 = vector.shape_cast %8 : vector<16x16xf32> to vector<1x16x16xf32>
    tpu.vector_store %arg6[%c0_3, %c0_4, %c0_5], %11 {strides = array<i32>} : memref<1x16x64xf32, #tpu.memory_space<vmem>>, vector<1x16x16xf32>,
    %12 = arith.index_cast %4 : i32 to index
    %c8 = arith.constant 8 : index
    %13 = vector.load %arg7[%12, %c8] : memref<16x32xf32, #tpu.memory_space<vmem>>, vector<16x8xf32>
    %c0_6 = arith.constant 0 : index
    %c8_7 = arith.constant 8 : index
    %14 = vector.load %arg8[%c0_6, %c8_7] : memref<16x32xf32, #tpu.memory_space<vmem>>, vector<16x8xf32>
    %cst_8 = arith.constant dense<0.000000e+00> : vector<16x16xf32>
    %15 = tpu.matmul %13, %14, %cst_8 {dimension_numbers = #tpu.dot_dimension_numbers<[1], [1], [0], [0], [0, 0, 1, 0], [], []>} : vector<16x8xf32>, vector<16x8xf32>, vector<16x16xf32> -> vector<16x16xf32>
    %c0_9 = arith.constant 0 : index
    %c0_10 = arith.constant 0 : index
    %c16 = arith.constant 16 : index
    %16 = vector.load %arg6[%c0_9, %c0_10, %c16] : memref<1x16x64xf32, #tpu.memory_space<vmem>>, vector<1x16x16xf32>
    %17 = vector.shape_cast %16 : vector<1x16x16xf32> to vector<16x16xf32>
    %18 = vector.shape_cast %15 : vector<16x16xf32> to vector<1x16x16xf32>
    tpu.vector_store %arg6[%c0_9, %c0_10, %c16], %18 {strides = array<i32>} : memref<1x16x64xf32, #tpu.memory_space<vmem>>, vector<1x16x16xf32>,
    %19 = arith.index_cast %4 : i32 to index
    %c16_11 = arith.constant 16 : index
    %20 = vector.load %arg7[%19, %c16_11] : memref<16x32xf32, #tpu.memory_space<vmem>>, vector<16x8xf32>
    %c0_12 = arith.constant 0 : index
    %c16_13 = arith.constant 16 : index
    %21 = vector.load %arg8[%c0_12, %c16_13] : memref<16x32xf32, #tpu.memory_space<vmem>>, vector<16x8xf32>
    %cst_14 = arith.constant dense<0.000000e+00> : vector<16x16xf32>
    %22 = tpu.matmul %20, %21, %cst_14 {dimension_numbers = #tpu.dot_dimension_numbers<[1], [1], [0], [0], [0, 0, 1, 0], [], []>} : vector<16x8xf32>, vector<16x8xf32>, vector<16x16xf32> -> vector<16x16xf32>
    %c0_15 = arith.constant 0 : index
    %c0_16 = arith.constant 0 : index
    %c32 = arith.constant 32 : index
    %23 = vector.load %arg6[%c0_15, %c0_16, %c32] : memref<1x16x64xf32, #tpu.memory_space<vmem>>, vector<1x16x16xf32>
    %24 = vector.shape_cast %23 : vector<1x16x16xf32> to vector<16x16xf32>
    %25 = vector.shape_cast %22 : vector<16x16xf32> to vector<1x16x16xf32>
    tpu.vector_store %arg6[%c0_15, %c0_16, %c32], %25 {strides = array<i32>} : memref<1x16x64xf32, #tpu.memory_space<vmem>>, vector<1x16x16xf32>,
    %26 = arith.index_cast %4 : i32 to index
    %c24 = arith.constant 24 : index
    %27 = vector.load %arg7[%26, %c24] : memref<16x32xf32, #tpu.memory_space<vmem>>, vector<16x8xf32>
    %c0_17 = arith.constant 0 : index
    %c24_18 = arith.constant 24 : index
    %28 = vector.load %arg8[%c0_17, %c24_18] : memref<16x32xf32, #tpu.memory_space<vmem>>, vector<16x8xf32>
    %cst_19 = arith.constant dense<0.000000e+00> : vector<16x16xf32>
    %29 = tpu.matmul %27, %28, %cst_19 {dimension_numbers = #tpu.dot_dimension_numbers<[1], [1], [0], [0], [0, 0, 1, 0], [], []>} : vector<16x8xf32>, vector<16x8xf32>, vector<16x16xf32> -> vector<16x16xf32>
    %c0_20 = arith.constant 0 : index
    %c0_21 = arith.constant 0 : index
    %c48 = arith.constant 48 : index
    %30 = vector.load %arg6[%c0_20, %c0_21, %c48] : memref<1x16x64xf32, #tpu.memory_space<vmem>>, vector<1x16x16xf32>
    %31 = vector.shape_cast %30 : vector<1x16x16xf32> to vector<16x16xf32>
    %32 = vector.shape_cast %29 : vector<16x16xf32> to vector<1x16x16xf32>
    tpu.vector_store %arg6[%c0_20, %c0_21, %c48], %32 {strides = array<i32>} : memref<1x16x64xf32, #tpu.memory_space<vmem>>, vector<1x16x16xf32>,
    return
  }
  func.func @transform_0(%arg0: i32, %arg1: i32) -> (i32, i32, i32) {
    %c0_i32 = arith.constant 0 : i32
    %c0_i32_0 = arith.constant 0 : i32
    %c0_i32_1 = arith.constant 0 : i32
    return %arg0, %c0_i32, %c0_i32_0 : i32, i32, i32
  }
  func.func @transform_1(%arg0: i32, %arg1: i32) -> (i32, i32) {
    %c0_i32 = arith.constant 0 : i32
    %c0_i32_0 = arith.constant 0 : i32
    %c0_i32_1 = arith.constant 0 : i32
    return %c0_i32, %c0_i32_0 : i32, i32
  }
  func.func @transform_2(%arg0: i32, %arg1: i32) -> (i32, i32) {
    %c0_i32 = arith.constant 0 : i32
    %c0_i32_0 = arith.constant 0 : i32
    %c0_i32_1 = arith.constant 0 : i32
    return %c0_i32, %c0_i32_0 : i32, i32
  }
  func.func @transform_3(%arg0: i32, %arg1: i32) -> (i32, i32) {
    %c0_i32 = arith.constant 0 : i32
    %c0_i32_0 = arith.constant 0 : i32
    %c0_i32_1 = arith.constant 0 : i32
    return %c0_i32, %c0_i32_0 : i32, i32
  }
  func.func @transform_4(%arg0: i32, %arg1: i32) -> (i32, i32, i32) {
    %c0_i32 = arith.constant 0 : i32
    %c0_i32_0 = arith.constant 0 : i32
    return %arg0, %arg1, %c0_i32 : i32, i32, i32
  }
}

</mosaic_0001>

<llo_original>
// kernel: tpu_custom_call.1
$region0: #{tpu_custom_call.1}
  #allocation0 [shape = 'u32[]', space=smem, size = 0x4, offset = 0x4, fixed_abs, tag = 'smem constant byte address 0x4 - core index']
  #allocation1 [shape = 'u32[144,128]{1,0:T(1,128)}', space=vmem, size = 0x12000, scoped, tag = 'internal scratch']
  #allocation2 [shape = 'f32[16,32]{1,0:T(8,128)}', space=vmem, size = 0x2000, scoped, tag = 'scratch operand']
  #allocation3 [shape = 'f32[16,32]{1,0:T(8,128)}', space=vmem, size = 0x2000, scoped, tag = 'scratch operand']
  %s0 = inlined_call_operand.hbm [shape: f32[2,16,32], index: 0, kind: input, shape index: {}]
  %s1 = inlined_call_operand.vmem [shape: f32[1,32], index: 1, kind: input, shape index: {}]
  %s2 = inlined_call_operand.vmem [shape: f32[1,32], index: 2, kind: input, shape index: {}]
  %s3 = inlined_call_operand.hbm [shape: f32[32,64], index: 3, kind: input, shape index: {}]
  %s4 = inlined_call_operand.hbm [shape: f32[2,16,64], index: 4, kind: output, shape index: {}]
  %s5 = sld [smem:[#allocation0]]
  $region61: #{tpu_custom_call.1} parent=0
    _
  %s7 = ssub.s32 1, %s5
  %s8 = scalar_select 0, %s7, %s5
  $region1: #{tpu_custom_call.1} parent=0
    #allocation4 [shape = 'u8[16384]{0}', space=vmem, size = 0x4000, scoped, tag = 'input window, operand 0']
    #allocation5 [shape = 's32[2]{0}', space=sflag, size = 0x8, scoped, tag = 'scoped memory for tpu_custom_call.1']
    #allocation6 [shape = 's32[2]{0}', space=sflag, size = 0x8, scoped, tag = 'scoped memory for tpu_custom_call.1']
    #allocation7 [shape = 'u8[16384]{0}', space=vmem, size = 0x4000, scoped, tag = 'input window, operand 3, single buffered']
    #allocation8 [shape = 's32[1]{0}', space=sflag, size = 0x4, scoped, tag = 'scoped memory for tpu_custom_call.1']
    #allocation9 [shape = 'u8[16384]{0}', space=vmem, size = 0x4000, scoped, tag = 'output window, operand 0']
    %9 = vsyncpa [#allocation5], 0
    %s10 = scalar_lea.sflag [#allocation5], 1
    %11 = vsyncpa %s10, 0
    %12 = vsyncpa [#allocation8], 0
    %13 = vsyncpa [#allocation6], 0
    %s14 = scalar_lea.sflag [#allocation6], 1
    %15 = vsyncpa %s14, 0
    loop: start=0, step=1, limit=4
    $region2: #{tpu_custom_call.1} parent=1 // loop_pre_header
      _
    $region3: #{tpu_custom_call.1} parent=1 // loop_header
      %s17 = sphi 0, %s21
      %p18 = scmp.ge.s32.totalorder %s17, 4
      %s24 = sphi 0, %s36
      %s25 = sphi 0, %s32
      %s26 = sphi 0, %s24
      %s27 = sphi 0, %s25
      %s28 = sphi 0, %s26
      %s29 = sphi 0, %s27
      %s39 = sphi 0, %s41
      %s42 = sphi 0, %s39
      %s43 = sphi 0, %s42
      %s59 = sphi 0, %s43
      %s63 = sphi 0, %s63
      %s65 = sphi 0, %s63
      %s66 = sphi 0, %s65
      %s80 = sphi 0, %s66
      %s84 = sphi 0, %s84
      %s86 = sphi 0, %s84
      %s87 = sphi 0, %s86
      %s101 = sphi 0, %s87
      %s105 = sphi 0, %s105
      %s107 = sphi 0, %s105
      %s108 = sphi 0, %s107
      %s122 = sphi 0, %s108
      %s130 = sphi 0, %s132
      %s133 = sphi 0, %s130
      %s134 = sphi 0, %s133
      %s150 = sphi 0, %s134
    $region4: #{tpu_custom_call.1} parent=1 // loop_header_branch
      %20 = sbr.rel (%p18) target = $region8
    $region5: #{tpu_custom_call.1} parent=1 // loop_body
      %s22 = ssub.s32 %s17, 1
      %s23 = ssub.s32 %s17, 2
      %s30 = sadd.s32 1, %s25
      %p31 = scmp.ge.s32.totalorder %s30, 1
      %s32 = scalar_select %p31, 0, %s30
      %s33 = sadd.s32 1, %s24
      %s34 = scalar_select %p31, %s33, %s24
      %p35 = scmp.ge.s32.totalorder %s34, 2
      %s36 = scalar_select %p35, 0, %s34
      %s37 = ssub.s32 %s24, %s36
      %p38 = scmp.eq.s32.totalorder %s37, 0
      %s40 = sadd.s32 %s39, 1
      %s41 = scalar_select %p38, %s39, %s40
      %p44 = pneg %p38
      %p45 = scmp.eq.s32.totalorder %s17, 1
      %p46 = por %p44, %p45
      %p47 = scmp.ne.s32.totalorder %s39, %s42
      %p48 = scmp.eq.s32.totalorder %s17, 0
      %p49 = por %p47, %p48
      %p50 = scmp.ne.s32.totalorder %s39, %s42
      %p51 = scmp.eq.s32.totalorder %s22, 1
      %p52 = por %p50, %p51
      %p53 = scmp.ne.s32.totalorder %s42, %s43
      %p54 = scmp.eq.s32.totalorder %s22, 0
      %p55 = por %p53, %p54
      %p56 = scmp.ne.s32.totalorder %s42, %s43
      %p57 = scmp.eq.s32.totalorder %s23, 1
      %p58 = por %p56, %p57
      %p60 = scmp.ne.s32.totalorder %s43, %s59
      %p61 = scmp.eq.s32.totalorder %s23, 0
      %p62 = por %p60, %p61
      %s64 = sadd.s32 %s63, 1
      %p67 = scmp.eq.s32.totalorder %s17, 1
      %p68 = scmp.ne.s32.totalorder %s63, %s65
      %p69 = scmp.eq.s32.totalorder %s17, 0
      %p70 = por %p68, %p69
      %p71 = scmp.ne.s32.totalorder %s63, %s65
      %p72 = scmp.eq.s32.totalorder %s22, 1
      %p73 = por %p71, %p72
      %p74 = scmp.ne.s32.totalorder %s65, %s66
      %p75 = scmp.eq.s32.totalorder %s22, 0
      %p76 = por %p74, %p75
      %p77 = scmp.ne.s32.totalorder %s65, %s66
      %p78 = scmp.eq.s32.totalorder %s23, 1
      %p79 = por %p77, %p78
      %p81 = scmp.ne.s32.totalorder %s66, %s80
      %p82 = scmp.eq.s32.totalorder %s23, 0
      %p83 = por %p81, %p82
      %s85 = sadd.s32 %s84, 1
      %p88 = scmp.eq.s32.totalorder %s17, 1
      %p89 = scmp.ne.s32.totalorder %s84, %s86
      %p90 = scmp.eq.s32.totalorder %s17, 0
      %p91 = por %p89, %p90
      %p92 = scmp.ne.s32.totalorder %s84, %s86
      %p93 = scmp.eq.s32.totalorder %s22, 1
      %p94 = por %p92, %p93
      %p95 = scmp.ne.s32.totalorder %s86, %s87
      %p96 = scmp.eq.s32.totalorder %s22, 0
      %p97 = por %p95, %p96
      %p98 = scmp.ne.s32.totalorder %s86, %s87
      %p99 = scmp.eq.s32.totalorder %s23, 1
      %p100 = por %p98, %p99
      %p102 = scmp.ne.s32.totalorder %s87, %s101
      %p103 = scmp.eq.s32.totalorder %s23, 0
      %p104 = por %p102, %p103
      %s106 = sadd.s32 %s105, 1
      %p109 = scmp.eq.s32.totalorder %s17, 1
      %p110 = scmp.ne.s32.totalorder %s105, %s107
      %p111 = scmp.eq.s32.totalorder %s17, 0
      %p112 = por %p110, %p111
      %p113 = scmp.ne.s32.totalorder %s105, %s107
      %p114 = scmp.eq.s32.totalorder %s22, 1
      %p115 = por %p113, %p114
      %p116 = scmp.ne.s32.totalorder %s107, %s108
      %p117 = scmp.eq.s32.totalorder %s22, 0
      %p118 = por %p116, %p117
      %p119 = scmp.ne.s32.totalorder %s107, %s108
      %p120 = scmp.eq.s32.totalorder %s23, 1
      %p121 = por %p119, %p120
      %p123 = scmp.ne.s32.totalorder %s108, %s122
      %p124 = scmp.eq.s32.totalorder %s23, 0
      %p125 = por %p123, %p124
      %s126 = ssub.s32 %s24, %s36
      %s127 = ssub.s32 %s25, %s32
      %s128 = sor.u32 %s126, %s127
      %p129 = scmp.eq.s32.totalorder %s128, 0
      %s131 = sadd.s32 %s130, 1
      %s132 = scalar_select %p129, %s130, %s131
      %p135 = pneg %p129
      %p136 = scmp.eq.s32.totalorder %s17, 1
      %p137 = por %p135, %p136
      %p138 = scmp.ne.s32.totalorder %s130, %s133
      %p139 = scmp.eq.s32.totalorder %s17, 0
      %p140 = por %p138, %p139
      %p141 = scmp.ne.s32.totalorder %s130, %s133
      %p142 = scmp.eq.s32.totalorder %s22, 1
      %p143 = por %p141, %p142
      %p144 = scmp.ne.s32.totalorder %s133, %s134
      %p145 = scmp.eq.s32.totalorder %s22, 0
      %p146 = por %p144, %p145
      %p147 = scmp.ne.s32.totalorder %s133, %s134
      %p148 = scmp.eq.s32.totalorder %s23, 1
      %p149 = por %p147, %p148
      %p151 = scmp.ne.s32.totalorder %s134, %s150
      %p152 = scmp.eq.s32.totalorder %s23, 0
      %p153 = por %p151, %p152
      %p154 = scmp.le.s32.totalorder 1, %s17
      %p155 = scmp.lt.s32.totalorder %s17, 3
      %p156 = pnand %p154, %p155
      %p157 = pneg %p156
      // Predicated region
      $region9: #{tpu_custom_call.1} parent=5 // pred_check
        _
      $region10: #{tpu_custom_call.1} parent=5 // pred_check_branch
        %159 = sbr.rel (%p156) target = $region12
      $region11: #{tpu_custom_call.1} parent=5 // pred_region
        %s160 = ssub.s32 %s17, 1
        // Predicated region
        $region13: #{tpu_custom_call.1} parent=11 // pred_check
          %p161 = pneg %p76
        $region14: #{tpu_custom_call.1} parent=11 // pred_check_branch
          %163 = sbr.rel (%p161) target = $region16
        $region15: #{tpu_custom_call.1} parent=11 // pred_region
          _
        $region16: #{tpu_custom_call.1} parent=11 // pred_fallthru
          _
        // Predicated region
        $region17: #{tpu_custom_call.1} parent=11 // pred_check
          %p164 = pneg %p97
        $region18: #{tpu_custom_call.1} parent=11 // pred_check_branch
          %166 = sbr.rel (%p164) target = $region20
        $region19: #{tpu_custom_call.1} parent=11 // pred_region
          _
        $region20: #{tpu_custom_call.1} parent=11 // pred_fallthru
          _
        // Predicated region
        $region21: #{tpu_custom_call.1} parent=11 // pred_check
          %p167 = pneg %p118
        $region22: #{tpu_custom_call.1} parent=11 // pred_check_branch
          %169 = sbr.rel (%p167) target = $region24
        $region23: #{tpu_custom_call.1} parent=11 // pred_region
          %s171 = ssub.s32 512, 512
          %172 = vsyncadd [#allocation8], %s171
          %s173 = sshll.u32 [#allocation7], 4
          %s174 = int_to_ptr.vmem [resolvable:$true] %s173
          %179 = dma.hbm_to_vmem [thread:$0]  %s3, 512, %s174, [#allocation8], 128, 128, 8
        $region24: #{tpu_custom_call.1} parent=11 // pred_fallthru
          _
      $region12: #{tpu_custom_call.1} parent=5 // pred_fallthru
        _
      %p180 = scmp.lt.s32.totalorder %s17, 2
      // Predicated region
      $region25: #{tpu_custom_call.1} parent=5 // pred_check
        %p181 = pneg %p180
      $region26: #{tpu_custom_call.1} parent=5 // pred_check_branch
        %183 = sbr.rel (%p181) target = $region28
      $region27: #{tpu_custom_call.1} parent=5 // pred_region
        // Predicated region
        $region29: #{tpu_custom_call.1} parent=27 // pred_check
          %p184 = pneg %p49
        $region30: #{tpu_custom_call.1} parent=27 // pred_check_branch
          %186 = sbr.rel (%p184) target = $region32
        $region31: #{tpu_custom_call.1} parent=27 // pred_region
          %s187 = sand.u32 %s39, 1
          %s188 = scalar_lea.sflag [#allocation5], %s187
          %s189 = sand.u32 %s39, 1
          %s190 = smul.addr %s189, 16
          %s191 = scalar_lea.vmem [#allocation4], %s190
          %s193 = ssub.s32 256, 256
          %194 = vsyncadd %s188, %s193
          %s195 = smul.addr %s24, 2
          %s196 = smul.addr %s195, 128
          %s197 = scalar_lea.hbm %s0, %s196
          %s198 = sshll.u32 %s191, 4
          %s199 = int_to_ptr.vmem [resolvable:$true] %s198
          %204 = dma.hbm_to_vmem [thread:$0]  %s197, 256, %s199, %s188, 128, 128, 8
        $region32: #{tpu_custom_call.1} parent=27 // pred_fallthru
          _
      $region28: #{tpu_custom_call.1} parent=5 // pred_fallthru
        _
      %p205 = scmp.le.s32.totalorder 1, %s17
      %p206 = scmp.lt.s32.totalorder %s17, 3
      %p207 = pnand %p205, %p206
      %p208 = pneg %p207
      // Predicated region
      $region33: #{tpu_custom_call.1} parent=5 // pred_check
        _
      $region34: #{tpu_custom_call.1} parent=5 // pred_check_branch
        %210 = sbr.rel (%p207) target = $region36
      $region35: #{tpu_custom_call.1} parent=5 // pred_region
        %s211 = ssub.s32 %s17, 1
        %s212 = sand.u32 %s42, 1
        %s213 = scalar_lea.sflag [#allocation5], %s212
        %s214 = sand.u32 %s42, 1
        %s215 = smul.addr %s214, 16
        %s216 = scalar_lea.vmem [#allocation4], %s215
        // Predicated region
        $region37: #{tpu_custom_call.1} parent=35 // pred_check
          %p217 = pneg %p55
        $region38: #{tpu_custom_call.1} parent=35 // pred_check_branch
          %219 = sbr.rel (%p217) target = $region40
        $region39: #{tpu_custom_call.1} parent=35 // pred_region
          %220 = dma.done %s213, 256
        $region40: #{tpu_custom_call.1} parent=35 // pred_fallthru
          _
        // Predicated region
        $region41: #{tpu_custom_call.1} parent=35 // pred_check
          %p221 = pneg %p118
        $region42: #{tpu_custom_call.1} parent=35 // pred_check_branch
          %223 = sbr.rel (%p221) target = $region44
        $region43: #{tpu_custom_call.1} parent=35 // pred_region
          %224 = dma.done [#allocation8], 512
        $region44: #{tpu_custom_call.1} parent=35 // pred_fallthru
          _
        %s225 = sand.u32 %s42, 1
        %s226 = scalar_lea.sflag [#allocation5], %s225
        %s227 = sand.u32 %s42, 1
        %s228 = smul.addr %s227, 16
        %s229 = scalar_lea.vmem [#allocation4], %s228
        %p230 = pneg %p55
        %p231 = pneg %p52
        %p232 = pneg %p76
        %p233 = pneg %p73
        %p234 = pneg %p97
        %p235 = pneg %p94
        %p236 = pneg %p118
        %p237 = pneg %p115
        %p238 = pneg %p146
        %p239 = pneg %p143
        %s240 = sand.u32 %s133, 1
        %s241 = scalar_lea.sflag [#allocation6], %s240
        %s242 = sand.u32 %s133, 1
        %s243 = smul.addr %s242, 16
        %s244 = scalar_lea.vmem [#allocation9], %s243
        %s245 = smul.u32 2, %s27
        %p246 = scmp.eq.s32.totalorder %s27, 0
        // Predicated region
        $region45: #{tpu_custom_call.1} parent=35 // pred_check
          %p247 = pneg %p246
        $region46: #{tpu_custom_call.1} parent=35 // pred_check_branch
          %249 = sbr.rel (%p247) target = $region48
        $region47: #{tpu_custom_call.1} parent=35 // pred_region
          %v250 = vld [vmem:[%s216] sm:$0xff]
          %v251 = vld [vmem:[%s216 + $0x8] sm:$0xff]
          %vm252 = vcmask 261120
          %v253 = vsel %vm252, %v250, 0.0
          %254 = vadd.xlane.f32.xlu0 %v253
          %v255 = vpop.xlane.xlu0 %254
          %v256 = vsel %vm252, %v251, 0.0
          %257 = vadd.xlane.f32.xlu0 %v256
          %v258 = vpop.xlane.xlu0 %257
          %v259 = vrcp.pop 32.0
          %v260 = vmul.f32 %v255, %v259
          %v261 = vmul.f32 %v258, %v259
          %v262 = vsub.f32 %v250, %v260
          %v263 = vsub.f32 %v251, %v261
          %v264 = vmul.f32 %v262, %v262
          %v265 = vmul.f32 %v263, %v263
          %v266 = vsel %vm252, %v264, 0.0
          %267 = vadd.xlane.f32.xlu0 %v266
          %v268 = vpop.xlane.xlu0 %267
          %v269 = vsel %vm252, %v265, 0.0
          %270 = vadd.xlane.f32.xlu0 %v269
          %v271 = vpop.xlane.xlu0 %270
          %v272 = vmul.f32 %v268, %v259
          %v273 = vmul.f32 %v271, %v259
          %v274 = vadd.f32 %v272, 1e-05
          %v275 = vadd.f32 %v273, 1e-05
          %v276 = vrsqrt.pop %v274
          %v277 = vrsqrt.pop %v275
          %v278 = vmul.f32 %v262, %v276
          %v279 = vmul.f32 %v263, %v277
          %v280 = vld [vmem:[%s1] sm:$0x1]
          %v282 = vlaneseq
          %v283 = vshrl.u32 %v282, 7
          %v284 = vsub.s32 0, %v283
          %v285 = vrot.slane %v280, %v284
          %v287 = vmul.f32 %v278, %v285
          %v288 = vmul.f32 %v279, %v285
          %v289 = vld [vmem:[%s2] sm:$0x1]
          %v291 = vlaneseq
          %v292 = vshrl.u32 %v291, 7
          %v293 = vsub.s32 0, %v292
          %v294 = vrot.slane %v289, %v293
          %v296 = vadd.f32 %v287, %v294
          %v297 = vadd.f32 %v288, %v294
          %v298 = vld [vmem:[#allocation7] sm:$0xff]
          %v299 = vld [vmem:[#allocation7 + $0x8] sm:$0xff]
          %v300 = vld [vmem:[#allocation7 + $0x10] sm:$0xff]
          %v301 = vld [vmem:[#allocation7 + $0x18] sm:$0xff]
          %v303 = vsel %vm252, %v296, 0
          %v306 = vsel %vm252, %v297, 0
          %308 = vmatprep.subr.mxu0 0.0
          %309 = vmatpush1.msra.mxu0 0.0
          %310 = vmatprep.subr.mxu0 0.0
          %311 = vmatpush1.msra.mxu0 0.0
          %312 = vmatprep.subr.mxu0 0.0
          %313 = vmatpush1.msra.mxu0 0.0
          %314 = vmatprep.subr.mxu0 0.0
          %315 = vmatpush1.msra.mxu0 0.0
          %316 = vmatprep.subr.mxu0 0.0
          %317 = vmatpush1.msra.mxu0 0.0
          %318 = vmatprep.subr.mxu0 0.0
          %319 = vmatpush1.msra.mxu0 0.0
          %320 = vmatprep.subr.mxu0 0.0
          %321 = vmatpush1.msra.mxu0 0.0
          %322 = vmatprep.subr.mxu0 0.0
          %323 = vmatpush1.msra.mxu0 0.0
          %324 = vmatprep.subr.mxu0 0.0
          %325 = vmatpush1.msra.mxu0 0.0
          %326 = vmatprep.subr.mxu0 0.0
          %327 = vmatpush1.msra.mxu0 0.0
          %328 = vmatprep.subr.mxu0 0.0
          %329 = vmatpush1.msra.mxu0 0.0
          %330 = vmatprep.subr.mxu0 0.0
          %331 = vmatpush1.msra.mxu0 0.0
          %332 = vmatprep.subr.mxu0 0.0
          %333 = vmatpush1.msra.mxu0 %v301
          %334 = vmatprep.subr.mxu0 0.0
          %335 = vmatpush1.msra.mxu0 %v300
          %336 = vmatprep.subr.mxu0 0.0
          %337 = vmatpush1.msra.mxu0 %v299
          %338 = vmatprep.subr.mxu0 0.0
          %339 = vmatpush1.msra.mxu0 %v298
          %340 = vmatprep.subr.mxu0 0.0
          %341 = vmatpush2.msra.mxu0 0.0
          %342 = vmatprep.subr.mxu0 0.0
          %343 = vmatpush2.msra.mxu0 0.0
          %344 = vmatprep.subr.mxu0 0.0
          %345 = vmatpush2.msra.mxu0 0.0
          %346 = vmatprep.subr.mxu0 0.0
          %347 = vmatpush2.msra.mxu0 0.0
          %348 = vmatprep.subr.mxu0 0.0
          %349 = vmatpush2.msra.mxu0 0.0
          %350 = vmatprep.subr.mxu0 0.0
          %351 = vmatpush2.msra.mxu0 0.0
          %352 = vmatprep.subr.mxu0 0.0
          %353 = vmatpush2.msra.mxu0 0.0
          %354 = vmatprep.subr.mxu0 0.0
          %355 = vmatpush2.msra.mxu0 0.0
          %356 = vmatprep.subr.mxu0 0.0
          %357 = vmatpush2.msra.mxu0 0.0
          %358 = vmatprep.subr.mxu0 0.0
          %359 = vmatpush2.msra.mxu0 0.0
          %360 = vmatprep.subr.mxu0 0.0
          %361 = vmatpush2.msra.mxu0 0.0
          %362 = vmatprep.subr.mxu0 0.0
          %363 = vmatpush2.msra.mxu0 0.0
          %364 = vmatprep.subr.mxu0 0.0
          %365 = vmatpush2.msra.mxu0 0.0
          %366 = vmatprep.subr.mxu0 0.0
          %367 = vmatpush2.msra.mxu0 0.0
          %368 = vmatprep.subr.mxu0 0.0
          %369 = vmatpush2.msra.mxu0 0.0
          %370 = vmatprep.subr.mxu0 0.0
          %371 = vmatpush2.msra.mxu0 0.0
          %372 = vmatprep.mubr.f32.mxu0 0.0
          %373 = vmatmul.mubr.f32.gmra.mxu0 %v303
          %v374 = vpop.f32.mrf.mxu0
          %v375 = vadd.f32 0.0, %v374
          %v376 = vpop.f32.mrf.mxu0
          %377 = vmatprep.mubr.f32.mxu0 0.0
          %378 = vmatmul.mubr.f32.gmra.mxu0 %v306
          %v379 = vpop.f32.mrf.mxu0
          %v380 = vadd.f32 0.0, %v379
          %v381 = vpop.f32.mrf.mxu0
          %382 = vdwg.mxu0
          %383 = vst.msk [vmem:[#allocation2] sm:$0xff] %vm252, %v375
          %384 = vst.msk [vmem:[#allocation2 + $0x8] sm:$0xff] %vm252, %v380
          %387 = vrot.lane.b32.xlu0 %v375, 96
          %v388 = vpop.permute.xlu0 %387
          %389 = vrot.lane.b32.xlu0 %v380, 96
          %v390 = vpop.permute.xlu0 %389
          %393 = vst.msk [vmem:[#allocation3] sm:$0xff] %vm252, %v388
          %394 = vst.msk [vmem:[#allocation3 + $0x8] sm:$0xff] %vm252, %v390
        $region48: #{tpu_custom_call.1} parent=35 // pred_fallthru
          _
        %s395 = smul.u32 %s27, 16
        %s396 = scalar_lea.vmem [#allocation2], %s395
        %v397 = vld [vmem:[%s396] sm:$0xff]
        %v398 = vld [vmem:[%s396 + $0x8] sm:$0xff]
        %v399 = vld [vmem:[#allocation3] sm:$0xff]
        %v400 = vld [vmem:[#allocation3 + $0x8] sm:$0xff]
        %vm401 = vcmask 64512
        %v403 = vsel %vm401, %v397, 0
        %v406 = vsel %vm401, %v398, 0
        %v409 = vsel %vm401, %v399, 0
        %v412 = vsel %vm401, %v400, 0
        %414 = vmatprep.subr.mxu0 0.0
        %415 = vmatpush1.xpose.msra.mxu0 0.0
        %416 = vmatprep.subr.mxu0 0.0
        %417 = vmatpush1.xpose.msra.mxu0 0.0
        %418 = vmatprep.subr.mxu0 0.0
        %419 = vmatpush1.xpose.msra.mxu0 0.0
        %420 = vmatprep.subr.mxu0 0.0
        %421 = vmatpush1.xpose.msra.mxu0 0.0
        %422 = vmatprep.subr.mxu0 0.0
        %423 = vmatpush1.xpose.msra.mxu0 0.0
        %424 = vmatprep.subr.mxu0 0.0
        %425 = vmatpush1.xpose.msra.mxu0 0.0
        %426 = vmatprep.subr.mxu0 0.0
        %427 = vmatpush1.xpose.msra.mxu0 0.0
        %428 = vmatprep.subr.mxu0 0.0
        %429 = vmatpush1.xpose.msra.mxu0 0.0
        %430 = vmatprep.subr.mxu0 0.0
        %431 = vmatpush1.xpose.msra.mxu0 0.0
        %432 = vmatprep.subr.mxu0 0.0
        %433 = vmatpush1.xpose.msra.mxu0 0.0
        %434 = vmatprep.subr.mxu0 0.0
        %435 = vmatpush1.xpose.msra.mxu0 0.0
        %436 = vmatprep.subr.mxu0 0.0
        %437 = vmatpush1.xpose.msra.mxu0 0.0
        %438 = vmatprep.subr.mxu0 0.0
        %439 = vmatpush1.xpose.msra.mxu0 0.0
        %440 = vmatprep.subr.mxu0 0.0
        %441 = vmatpush1.xpose.msra.mxu0 0.0
        %442 = vmatprep.subr.mxu0 0.0
        %443 = vmatpush1.xpose.msra.mxu0 %v412
        %444 = vmatprep.subr.mxu0 0.0
        %445 = vmatpush1.xpose.msra.mxu0 %v409
        %446 = vmatprep.subr.mxu0 0.0
        %447 = vmatpush2.xpose.msra.mxu0 0.0
        %448 = vmatprep.subr.mxu0 0.0
        %449 = vmatpush2.xpose.msra.mxu0 0.0
        %450 = vmatprep.subr.mxu0 0.0
        %451 = vmatpush2.xpose.msra.mxu0 0.0
        %452 = vmatprep.subr.mxu0 0.0
        %453 = vmatpush2.xpose.msra.mxu0 0.0
        %454 = vmatprep.subr.mxu0 0.0
        %455 = vmatpush2.xpose.msra.mxu0 0.0
        %456 = vmatprep.subr.mxu0 0.0
        %457 = vmatpush2.xpose.msra.mxu0 0.0
        %458 = vmatprep.subr.mxu0 0.0
        %459 = vmatpush2.xpose.msra.mxu0 0.0
        %460 = vmatprep.subr.mxu0 0.0
        %461 = vmatpush2.xpose.msra.mxu0 0.0
        %462 = vmatprep.subr.mxu0 0.0
        %463 = vmatpush2.xpose.msra.mxu0 0.0
        %464 = vmatprep.subr.mxu0 0.0
        %465 = vmatpush2.xpose.msra.mxu0 0.0
        %466 = vmatprep.subr.mxu0 0.0
        %467 = vmatpush2.xpose.msra.mxu0 0.0
        %468 = vmatprep.subr.mxu0 0.0
        %469 = vmatpush2.xpose.msra.mxu0 0.0
        %470 = vmatprep.subr.mxu0 0.0
        %471 = vmatpush2.xpose.msra.mxu0 0.0
        %472 = vmatprep.subr.mxu0 0.0
        %473 = vmatpush2.xpose.msra.mxu0 0.0
        %474 = vmatprep.subr.mxu0 0.0
        %475 = vmatpush2.xpose.msra.mxu0 0.0
        %476 = vmatprep.subr.mxu0 0.0
        %477 = vmatpush2.xpose.msra.mxu0 0.0
        %478 = vmatprep.mubr.f32.mxu0 0.0
        %479 = vmatmul.mubr.f32.gmra.mxu0 %v403
        %v480 = vpop.f32.mrf.mxu0
        %v481 = vadd.f32 0.0, %v480
        %v482 = vpop.f32.mrf.mxu0
        %483 = vmatprep.mubr.f32.mxu0 0.0
        %484 = vmatmul.mubr.f32.gmra.mxu0 %v406
        %v485 = vpop.f32.mrf.mxu0
        %v486 = vadd.f32 0.0, %v485
        %v487 = vpop.f32.mrf.mxu0
        %488 = vdwg.mxu0
        %vm489 = vcmask 130048
        %490 = vst.msk [vmem:[%s244] sm:$0xff] %vm489, %v481
        %491 = vst.msk [vmem:[%s244 + $0x8] sm:$0xff] %vm489, %v486
        %v492 = vld [vmem:[%s396] sm:$0xff]
        %v493 = vld [vmem:[%s396 + $0x8] sm:$0xff]
        %v494 = vld [vmem:[#allocation3] sm:$0xff]
        %v495 = vld [vmem:[#allocation3 + $0x8] sm:$0xff]
        %498 = vrot.lane.b32.xlu0 %v492, 120
        %v499 = vpop.permute.xlu0 %498
        %500 = vrot.lane.b32.xlu0 %v493, 120
        %v501 = vpop.permute.xlu0 %500
        %504 = vrot.lane.b32.xlu0 %v494, 120
        %v505 = vpop.permute.xlu0 %504
        %506 = vrot.lane.b32.xlu0 %v495, 120
        %v507 = vpop.permute.xlu0 %506
        %v508 = vsel %vm401, %v499, 0
        %v510 = vsel %vm401, %v501, 0
        %v512 = vsel %vm401, %v505, 0
        %v514 = vsel %vm401, %v507, 0
        %516 = vmatprep.subr.mxu0 0.0
        %517 = vmatpush1.xpose.msra.mxu0 0.0
        %518 = vmatprep.subr.mxu0 0.0
        %519 = vmatpush1.xpose.msra.mxu0 0.0
        %520 = vmatprep.subr.mxu0 0.0
        %521 = vmatpush1.xpose.msra.mxu0 0.0
        %522 = vmatprep.subr.mxu0 0.0
        %523 = vmatpush1.xpose.msra.mxu0 0.0
        %524 = vmatprep.subr.mxu0 0.0
        %525 = vmatpush1.xpose.msra.mxu0 0.0
        %526 = vmatprep.subr.mxu0 0.0
        %527 = vmatpush1.xpose.msra.mxu0 0.0
        %528 = vmatprep.subr.mxu0 0.0
        %529 = vmatpush1.xpose.msra.mxu0 0.0
        %530 = vmatprep.subr.mxu0 0.0
        %531 = vmatpush1.xpose.msra.mxu0 0.0
        %532 = vmatprep.subr.mxu0 0.0
        %533 = vmatpush1.xpose.msra.mxu0 0.0
        %534 = vmatprep.subr.mxu0 0.0
        %535 = vmatpush1.xpose.msra.mxu0 0.0
        %536 = vmatprep.subr.mxu0 0.0
        %537 = vmatpush1.xpose.msra.mxu0 0.0
        %538 = vmatprep.subr.mxu0 0.0
        %539 = vmatpush1.xpose.msra.mxu0 0.0
        %540 = vmatprep.subr.mxu0 0.0
        %541 = vmatpush1.xpose.msra.mxu0 0.0
        %542 = vmatprep.subr.mxu0 0.0
        %543 = vmatpush1.xpose.msra.mxu0 0.0
        %544 = vmatprep.subr.mxu0 0.0
        %545 = vmatpush1.xpose.msra.mxu0 %v514
        %546 = vmatprep.subr.mxu0 0.0
        %547 = vmatpush1.xpose.msra.mxu0 %v512
        %548 = vmatprep.subr.mxu0 0.0
        %549 = vmatpush2.xpose.msra.mxu0 0.0
        %550 = vmatprep.subr.mxu0 0.0
        %551 = vmatpush2.xpose.msra.mxu0 0.0
        %552 = vmatprep.subr.mxu0 0.0
        %553 = vmatpush2.xpose.msra.mxu0 0.0
        %554 = vmatprep.subr.mxu0 0.0
        %555 = vmatpush2.xpose.msra.mxu0 0.0
        %556 = vmatprep.subr.mxu0 0.0
        %557 = vmatpush2.xpose.msra.mxu0 0.0
        %558 = vmatprep.subr.mxu0 0.0
        %559 = vmatpush2.xpose.msra.mxu0 0.0
        %560 = vmatprep.subr.mxu0 0.0
        %561 = vmatpush2.xpose.msra.mxu0 0.0
        %562 = vmatprep.subr.mxu0 0.0
        %563 = vmatpush2.xpose.msra.mxu0 0.0
        %564 = vmatprep.subr.mxu0 0.0
        %565 = vmatpush2.xpose.msra.mxu0 0.0
        %566 = vmatprep.subr.mxu0 0.0
        %567 = vmatpush2.xpose.msra.mxu0 0.0
        %568 = vmatprep.subr.mxu0 0.0
        %569 = vmatpush2.xpose.msra.mxu0 0.0
        %570 = vmatprep.subr.mxu0 0.0
        %571 = vmatpush2.xpose.msra.mxu0 0.0
        %572 = vmatprep.subr.mxu0 0.0
        %573 = vmatpush2.xpose.msra.mxu0 0.0
        %574 = vmatprep.subr.mxu0 0.0
        %575 = vmatpush2.xpose.msra.mxu0 0.0
        %576 = vmatprep.subr.mxu0 0.0
        %577 = vmatpush2.xpose.msra.mxu0 0.0
        %578 = vmatprep.subr.mxu0 0.0
        %579 = vmatpush2.xpose.msra.mxu0 0.0
        %580 = vmatprep.mubr.f32.mxu0 0.0
        %581 = vmatmul.mubr.f32.gmra.mxu0 %v508
        %v582 = vpop.f32.mrf.mxu0
        %v583 = vadd.f32 0.0, %v582
        %v584 = vpop.f32.mrf.mxu0
        %585 = vmatprep.mubr.f32.mxu0 0.0
        %586 = vmatmul.mubr.f32.gmra.mxu0 %v510
        %v587 = vpop.f32.mrf.mxu0
        %v588 = vadd.f32 0.0, %v587
        %v589 = vpop.f32.mrf.mxu0
        %590 = vdwg.mxu0
        %593 = vrot.lane.b32.xlu0 %v583, 16
        %v594 = vpop.permute.xlu0 %593
        %595 = vrot.lane.b32.xlu0 %v588, 16
        %v596 = vpop.permute.xlu0 %595
        %vm599 = vcmask 261248
        %600 = vst.msk [vmem:[%s244] sm:$0xff] %vm599, %v594
        %601 = vst.msk [vmem:[%s244 + $0x8] sm:$0xff] %vm599, %v596
        %v602 = vld [vmem:[%s396] sm:$0xff]
        %v603 = vld [vmem:[%s396 + $0x8] sm:$0xff]
        %v604 = vld [vmem:[#allocation3] sm:$0xff]
        %v605 = vld [vmem:[#allocation3 + $0x8] sm:$0xff]
        %608 = vrot.lane.b32.xlu0 %v602, 112
        %v609 = vpop.permute.xlu0 %608
        %610 = vrot.lane.b32.xlu0 %v603, 112
        %v611 = vpop.permute.xlu0 %610
        %614 = vrot.lane.b32.xlu0 %v604, 112
        %v615 = vpop.permute.xlu0 %614
        %616 = vrot.lane.b32.xlu0 %v605, 112
        %v617 = vpop.permute.xlu0 %616
        %v618 = vsel %vm401, %v609, 0
        %v620 = vsel %vm401, %v611, 0
        %v622 = vsel %vm401, %v615, 0
        %v624 = vsel %vm401, %v617, 0
        %626 = vmatprep.subr.mxu0 0.0
        %627 = vmatpush1.xpose.msra.mxu0 0.0
        %628 = vmatprep.subr.mxu0 0.0
        %629 = vmatpush1.xpose.msra.mxu0 0.0
        %630 = vmatprep.subr.mxu0 0.0
        %631 = vmatpush1.xpose.msra.mxu0 0.0
        %632 = vmatprep.subr.mxu0 0.0
        %633 = vmatpush1.xpose.msra.mxu0 0.0
        %634 = vmatprep.subr.mxu0 0.0
        %635 = vmatpush1.xpose.msra.mxu0 0.0
        %636 = vmatprep.subr.mxu0 0.0
        %637 = vmatpush1.xpose.msra.mxu0 0.0
        %638 = vmatprep.subr.mxu0 0.0
        %639 = vmatpush1.xpose.msra.mxu0 0.0
        %640 = vmatprep.subr.mxu0 0.0
        %641 = vmatpush1.xpose.msra.mxu0 0.0
        %642 = vmatprep.subr.mxu0 0.0
        %643 = vmatpush1.xpose.msra.mxu0 0.0
        %644 = vmatprep.subr.mxu0 0.0
        %645 = vmatpush1.xpose.msra.mxu0 0.0
        %646 = vmatprep.subr.mxu0 0.0
        %647 = vmatpush1.xpose.msra.mxu0 0.0
        %648 = vmatprep.subr.mxu0 0.0
        %649 = vmatpush1.xpose.msra.mxu0 0.0
        %650 = vmatprep.subr.mxu0 0.0
        %651 = vmatpush1.xpose.msra.mxu0 0.0
        %652 = vmatprep.subr.mxu0 0.0
        %653 = vmatpush1.xpose.msra.mxu0 0.0
        %654 = vmatprep.subr.mxu0 0.0
        %655 = vmatpush1.xpose.msra.mxu0 %v624
        %656 = vmatprep.subr.mxu0 0.0
        %657 = vmatpush1.xpose.msra.mxu0 %v622
        %658 = vmatprep.subr.mxu0 0.0
        %659 = vmatpush2.xpose.msra.mxu0 0.0
        %660 = vmatprep.subr.mxu0 0.0
        %661 = vmatpush2.xpose.msra.mxu0 0.0
        %662 = vmatprep.subr.mxu0 0.0
        %663 = vmatpush2.xpose.msra.mxu0 0.0
        %664 = vmatprep.subr.mxu0 0.0
        %665 = vmatpush2.xpose.msra.mxu0 0.0
        %666 = vmatprep.subr.mxu0 0.0
        %667 = vmatpush2.xpose.msra.mxu0 0.0
        %668 = vmatprep.subr.mxu0 0.0
        %669 = vmatpush2.xpose.msra.mxu0 0.0
        %670 = vmatprep.subr.mxu0 0.0
        %671 = vmatpush2.xpose.msra.mxu0 0.0
        %672 = vmatprep.subr.mxu0 0.0
        %673 = vmatpush2.xpose.msra.mxu0 0.0
        %674 = vmatprep.subr.mxu0 0.0
        %675 = vmatpush2.xpose.msra.mxu0 0.0
        %676 = vmatprep.subr.mxu0 0.0
        %677 = vmatpush2.xpose.msra.mxu0 0.0
        %678 = vmatprep.subr.mxu0 0.0
        %679 = vmatpush2.xpose.msra.mxu0 0.0
        %680 = vmatprep.subr.mxu0 0.0
        %681 = vmatpush2.xpose.msra.mxu0 0.0
        %682 = vmatprep.subr.mxu0 0.0
        %683 = vmatpush2.xpose.msra.mxu0 0.0
        %684 = vmatprep.subr.mxu0 0.0
        %685 = vmatpush2.xpose.msra.mxu0 0.0
        %686 = vmatprep.subr.mxu0 0.0
        %687 = vmatpush2.xpose.msra.mxu0 0.0
        %688 = vmatprep.subr.mxu0 0.0
        %689 = vmatpush2.xpose.msra.mxu0 0.0
        %690 = vmatprep.mubr.f32.mxu0 0.0
        %691 = vmatmul.mubr.f32.gmra.mxu0 %v618
        %v692 = vpop.f32.mrf.mxu0
        %v693 = vadd.f32 0.0, %v692
        %v694 = vpop.f32.mrf.mxu0
        %695 = vmatprep.mubr.f32.mxu0 0.0
        %696 = vmatmul.mubr.f32.gmra.mxu0 %v620
        %v697 = vpop.f32.mrf.mxu0
        %v698 = vadd.f32 0.0, %v697
        %v699 = vpop.f32.mrf.mxu0
        %700 = vdwg.mxu0
        %703 = vrot.lane.b32.xlu0 %v693, 32
        %v704 = vpop.permute.xlu0 %703
        %705 = vrot.lane.b32.xlu0 %v698, 32
        %v706 = vpop.permute.xlu0 %705
        %vm709 = vcmask 392448
        %710 = vst.msk [vmem:[%s244] sm:$0xff] %vm709, %v704
        %711 = vst.msk [vmem:[%s244 + $0x8] sm:$0xff] %vm709, %v706
        %v712 = vld [vmem:[%s396] sm:$0xff]
        %v713 = vld [vmem:[%s396 + $0x8] sm:$0xff]
        %v714 = vld [vmem:[#allocation3] sm:$0xff]
        %v715 = vld [vmem:[#allocation3 + $0x8] sm:$0xff]
        %718 = vrot.lane.b32.xlu0 %v712, 104
        %v719 = vpop.permute.xlu0 %718
        %720 = vrot.lane.b32.xlu0 %v713, 104
        %v721 = vpop.permute.xlu0 %720
        %724 = vrot.lane.b32.xlu0 %v714, 104
        %v725 = vpop.permute.xlu0 %724
        %726 = vrot.lane.b32.xlu0 %v715, 104
        %v727 = vpop.permute.xlu0 %726
        %v728 = vsel %vm401, %v719, 0
        %v730 = vsel %vm401, %v721, 0
        %v732 = vsel %vm401, %v725, 0
        %v734 = vsel %vm401, %v727, 0
        %736 = vmatprep.subr.mxu0 0.0
        %737 = vmatpush1.xpose.msra.mxu0 0.0
        %738 = vmatprep.subr.mxu0 0.0
        %739 = vmatpush1.xpose.msra.mxu0 0.0
        %740 = vmatprep.subr.mxu0 0.0
        %741 = vmatpush1.xpose.msra.mxu0 0.0
        %742 = vmatprep.subr.mxu0 0.0
        %743 = vmatpush1.xpose.msra.mxu0 0.0
        %744 = vmatprep.subr.mxu0 0.0
        %745 = vmatpush1.xpose.msra.mxu0 0.0
        %746 = vmatprep.subr.mxu0 0.0
        %747 = vmatpush1.xpose.msra.mxu0 0.0
        %748 = vmatprep.subr.mxu0 0.0
        %749 = vmatpush1.xpose.msra.mxu0 0.0
        %750 = vmatprep.subr.mxu0 0.0
        %751 = vmatpush1.xpose.msra.mxu0 0.0
        %752 = vmatprep.subr.mxu0 0.0
        %753 = vmatpush1.xpose.msra.mxu0 0.0
        %754 = vmatprep.subr.mxu0 0.0
        %755 = vmatpush1.xpose.msra.mxu0 0.0
        %756 = vmatprep.subr.mxu0 0.0
        %757 = vmatpush1.xpose.msra.mxu0 0.0
        %758 = vmatprep.subr.mxu0 0.0
        %759 = vmatpush1.xpose.msra.mxu0 0.0
        %760 = vmatprep.subr.mxu0 0.0
        %761 = vmatpush1.xpose.msra.mxu0 0.0
        %762 = vmatprep.subr.mxu0 0.0
        %763 = vmatpush1.xpose.msra.mxu0 0.0
        %764 = vmatprep.subr.mxu0 0.0
        %765 = vmatpush1.xpose.msra.mxu0 %v734
        %766 = vmatprep.subr.mxu0 0.0
        %767 = vmatpush1.xpose.msra.mxu0 %v732
        %768 = vmatprep.subr.mxu0 0.0
        %769 = vmatpush2.xpose.msra.mxu0 0.0
        %770 = vmatprep.subr.mxu0 0.0
        %771 = vmatpush2.xpose.msra.mxu0 0.0
        %772 = vmatprep.subr.mxu0 0.0
        %773 = vmatpush2.xpose.msra.mxu0 0.0
        %774 = vmatprep.subr.mxu0 0.0
        %775 = vmatpush2.xpose.msra.mxu0 0.0
        %776 = vmatprep.subr.mxu0 0.0
        %777 = vmatpush2.xpose.msra.mxu0 0.0
        %778 = vmatprep.subr.mxu0 0.0
        %779 = vmatpush2.xpose.msra.mxu0 0.0
        %780 = vmatprep.subr.mxu0 0.0
        %781 = vmatpush2.xpose.msra.mxu0 0.0
        %782 = vmatprep.subr.mxu0 0.0
        %783 = vmatpush2.xpose.msra.mxu0 0.0
        %784 = vmatprep.subr.mxu0 0.0
        %785 = vmatpush2.xpose.msra.mxu0 0.0
        %786 = vmatprep.subr.mxu0 0.0
        %787 = vmatpush2.xpose.msra.mxu0 0.0
        %788 = vmatprep.subr.mxu0 0.0
        %789 = vmatpush2.xpose.msra.mxu0 0.0
        %790 = vmatprep.subr.mxu0 0.0
        %791 = vmatpush2.xpose.msra.mxu0 0.0
        %792 = vmatprep.subr.mxu0 0.0
        %793 = vmatpush2.xpose.msra.mxu0 0.0
        %794 = vmatprep.subr.mxu0 0.0
        %795 = vmatpush2.xpose.msra.mxu0 0.0
        %796 = vmatprep.subr.mxu0 0.0
        %797 = vmatpush2.xpose.msra.mxu0 0.0
        %798 = vmatprep.subr.mxu0 0.0
        %799 = vmatpush2.xpose.msra.mxu0 0.0
        %800 = vmatprep.mubr.f32.mxu0 0.0
        %801 = vmatmul.mubr.f32.gmra.mxu0 %v728
        %v802 = vpop.f32.mrf.mxu0
        %v803 = vadd.f32 0.0, %v802
        %v804 = vpop.f32.mrf.mxu0
        %805 = vmatprep.mubr.f32.mxu0 0.0
        %806 = vmatmul.mubr.f32.gmra.mxu0 %v730
        %v807 = vpop.f32.mrf.mxu0
        %v808 = vadd.f32 0.0, %v807
        %v809 = vpop.f32.mrf.mxu0
        %810 = vdwg.mxu0
        %813 = vrot.lane.b32.xlu0 %v803, 48
        %v814 = vpop.permute.xlu0 %813
        %815 = vrot.lane.b32.xlu0 %v808, 48
        %v816 = vpop.permute.xlu0 %815
        %vm819 = vcmask 523648
        %820 = vst.msk [vmem:[%s244] sm:$0xff] %vm819, %v814
        %821 = vst.msk [vmem:[%s244 + $0x8] sm:$0xff] %vm819, %v816
        %s822 = sand.u32 %s133, 1
        %s823 = scalar_lea.sflag [#allocation6], %s822
        %s824 = sand.u32 %s133, 1
        %s825 = smul.addr %s824, 16
        %s826 = scalar_lea.vmem [#allocation9], %s825
        // Predicated region
        $region49: #{tpu_custom_call.1} parent=35 // pred_check
          %p827 = pneg %p143
        $region50: #{tpu_custom_call.1} parent=35 // pred_check_branch
          %829 = sbr.rel (%p827) target = $region52
        $region51: #{tpu_custom_call.1} parent=35 // pred_region
          %s830 = smul.u32 2, %s27
          %s832 = ssub.s32 256, 256
          %833 = vsyncadd %s823, %s832
          %s834 = smul.addr %s26, 2
          %s835 = sadd.s32 %s830, %s834
          %s836 = smul.addr %s835, 128
          %s837 = scalar_lea.hbm %s4, %s836
          %s838 = sshll.u32 %s826, 4
          %s839 = int_to_ptr.vmem [resolvable:$true] %s838
          %844 = dma.vmem_to_hbm [thread:$0]  %s839, 256, %s837, %s823, 128, 128, 8
        $region52: #{tpu_custom_call.1} parent=35 // pred_fallthru
          _
      $region36: #{tpu_custom_call.1} parent=5 // pred_fallthru
        _
      %p845 = scmp.le.s32.totalorder 2, %s17
      // Predicated region
      $region53: #{tpu_custom_call.1} parent=5 // pred_check
        %p846 = pneg %p845
      $region54: #{tpu_custom_call.1} parent=5 // pred_check_branch
        %848 = sbr.rel (%p846) target = $region56
      $region55: #{tpu_custom_call.1} parent=5 // pred_region
        %s849 = ssub.s32 %s17, 2
        // Predicated region
        $region57: #{tpu_custom_call.1} parent=55 // pred_check
          %p850 = pneg %p149
        $region58: #{tpu_custom_call.1} parent=55 // pred_check_branch
          %852 = sbr.rel (%p850) target = $region60
        $region59: #{tpu_custom_call.1} parent=55 // pred_region
          %s853 = sand.u32 %s134, 1
          %s854 = scalar_lea.sflag [#allocation6], %s853
          %s855 = sand.u32 %s134, 1
          %s856 = smul.addr %s855, 16
          %s857 = scalar_lea.vmem [#allocation9], %s856
          %858 = dma.done %s854, 256
        $region60: #{tpu_custom_call.1} parent=55 // pred_fallthru
          _
      $region56: #{tpu_custom_call.1} parent=5 // pred_fallthru
        _
    $region6: #{tpu_custom_call.1} parent=1 // loop_footer
      %s21 = sadd.s32 1, %s17
    $region7: #{tpu_custom_call.1} parent=1 // loop_footer_branch
      %16 = sbr.rel target = $region3
    $region8: #{tpu_custom_call.1} parent=1 // loop_exit
      _
    %859 = vsyncpa [#allocation5], 1
    %s860 = scalar_lea.sflag [#allocation5], 1
    %861 = vsyncpa %s860, 1
    %862 = vsyncpa [#allocation8], 1
    %863 = vsyncpa [#allocation6], 1
    %s864 = scalar_lea.sflag [#allocation6], 1
    %865 = vsyncpa %s864, 1

</llo_original>
